<compile_context>
chip_gen: v6e
topology: v6e:2x2x1
jax: 0.10.0
libtpu: 0.0.40
codegen_flags: <defaults>
</compile_context>

<pallas_src>
import functools

import jax
import jax.numpy as jnp
from jax import lax
from jax.experimental import pallas as pl
from jax.experimental.pallas import tpu as pltpu


def _coord_conv_kernel(x_ref, w_ref, bmap_ref, o_ref, pad_ref, col_ref, *,
                       C, H, W, KH, KW, padding):
    """One batch block (block_b elements) per grid step.

    x_ref   : (Bb, C, H, W)           raw (unpadded) data channels, NCHW slice
    w_ref   : (Cout, KH*KW*Cp)        repacked data-channel weight (zero cols
                                      on the channel-pad rows)
    bmap_ref: (Cout, Np)              bias + coord-channel conv contribution,
                                      in the strided column layout (Np = Ho*Wp)
    o_ref   : (Bb, Cout, Np)          strided, lane-dense output
    pad_ref : (Bb, Cp, Hp*Wp+KW-1)    VMEM scratch: flat zero-padded data
    col_ref : (KH*KW*Cp, Np)          VMEM scratch: strided im2col (one elem)
    """
    Bb = x_ref.shape[0]
    Cp = pad_ref.shape[1]
    Hp = H + 2 * padding
    Wp = W + 2 * padding
    Ho = Hp - KH + 1
    Wo = Wp - KW + 1
    Np = Ho * Wp                           # strided columns (row stride Wp)

    # (4) Zero the flat pad buffer (borders, channel-pad rows, slice tail).
    # Lane-dense full-width stores; done every step so it is also correct if a
    # core-parallel grid split hands this core a non-zero first program_id.
    pad_ref[...] = jnp.zeros_like(pad_ref)

    # (5) In-kernel zero padding: drop the H data rows into the flat buffer at
    # row stride Wp.  H small masked stores per step instead of an extra XLA
    # pad pass over the activation in HBM.
    # TODO(synk): for very large H switch this static unroll to pl.loop.
    for r in range(H):
        dst = (r + padding) * Wp + padding
        pad_ref[:, :C, dst:dst + W] = x_ref[:, :, r, :].astype(jnp.float32)

    w = w_ref[...]                         # (Cout, KH*KW*Cp)   hoisted loads
    bmap = bmap_ref[...]                   # (Cout, Np)

    for b in range(Bb):
        xflat = pad_ref[b]                 # (Cp, Hp*Wp + KW - 1)
        # (3) Strided im2col: every tap is a contiguous lane slice of xflat —
        # no (Cp, Ho, Wo) -> (Cp, Ho*Wo) relayout.  Stores are Cp-sublane
        # aligned and lane-dense (Np columns).
        for ky in range(KH):
            for kx in range(KW):
                t = ky * KW + kx
                s = ky * Wp + kx
                col_ref[t * Cp:(t + 1) * Cp, :] = xflat[:, s:s + Np]
        # Single MXU matmul per batch element, f32 accumulation.
        # NOTE: on v6e/v7x cast operands to bf16 (keep preferred_element_type
        # f32) once channel counts / spatial sizes grow; at these tiny shapes
        # the MXU has plenty of slack so f32 is kept (and v5e prefers f32).
        out = jnp.dot(w, col_ref[...], preferred_element_type=jnp.float32)
        o_ref[b] = (out + bmap).astype(o_ref.dtype)          # (2) bias+coords


def coord_conv_forward(x, weight, bias, *, has_radial_dist=False, padding=1,
                       block_b=None):
    """JAX/Pallas equivalent of Coord_Conv.forward (NCHW in / NCHW out)."""
    B, C, H, W = x.shape
    Cout, Cin_tot, KH, KW = weight.shape
    n_coord = 2 + (1 if has_radial_dist else 0)
    assert Cin_tot == C + n_coord, "weight channels must equal C + coord channels"

    Hp, Wp = H + 2 * padding, W + 2 * padding
    Ho, Wo = Hp - KH + 1, Wp - KW + 1
    Np = Ho * Wp                           # strided columns produced in-kernel
    Cp = ((C + 7) // 8) * 8                # sublane-aligned data channel count
    flat_len = Hp * Wp + (KW - 1)          # tail so every tap slice is in-bounds

    # ---- (2) batch-invariant coordinate-channel contribution (hoisted) -----
    # xx varies along H, yy along W (matches torch.linspace/repeat/transpose).
    xs = jnp.linspace(-1.0, 1.0, H, dtype=jnp.float32)
    ys = jnp.linspace(-1.0, 1.0, W, dtype=jnp.float32)
    xx = jnp.broadcast_to(xs[:, None], (H, W))
    yy = jnp.broadcast_to(ys[None, :], (H, W))
    coord_planes = [xx, yy]
    if has_radial_dist:
        coord_planes.append(jnp.sqrt(xx * xx + yy * yy))
    coords = jnp.stack(coord_planes, axis=0)                     # (n_coord, H, W)
    coords_p = jnp.pad(coords, ((0, 0), (padding, padding), (padding, padding)))
    w_coord = weight[:, C:, :, :].astype(jnp.float32)            # (Cout, n_coord, KH, KW)
    contrib = jnp.zeros((Cout, Ho, Wo), jnp.float32)
    for ky in range(KH):                                         # tiny, one-time
        for kx in range(KW):
            patch = coords_p[:, ky:ky + Ho, kx:kx + Wo]
            contrib = contrib + jnp.einsum(
                "oj,jyx->oyx", w_coord[:, :, ky, kx], patch,
                precision=lax.Precision.HIGHEST)
    bmap = contrib + bias.astype(jnp.float32)[:, None, None]     # (Cout, Ho, Wo)
    # place into the kernel's strided (row stride Wp) column layout
    bmap = jnp.pad(bmap, ((0, 0), (0, 0), (0, Wp - Wo))).reshape(Cout, Np)

    # ---- data-channel weight repack (tap-major, channel-minor, pad to Cp) --
    w_data = jnp.transpose(weight[:, :C, :, :], (0, 2, 3, 1))    # (Cout, KH, KW, C)
    w_data = jnp.pad(w_data, ((0, 0), (0, 0), (0, 0), (0, Cp - C)))
    w_flat = w_data.reshape(Cout, KH * KW * Cp).astype(jnp.float32)

    # ---- (1) batch blocking -------------------------------------------------
    if block_b is None:
        block_b = max(1, B // 2)           # keep >= 2 grid steps (v7x: 2 TCs)
    per_elem = 4 * (2 * C * H * W + Cp * flat_len + 2 * Cout * Np)
    block_b = max(1, min(block_b, (4 << 20) // max(per_elem, 1)))
    while B % block_b:
        block_b -= 1
    grid_b = B // block_b

    kernel = functools.partial(_coord_conv_kernel, C=C, H=H, W=W, KH=KH, KW=KW,
                               padding=padding)

    out_strided = pl.pallas_call(
        kernel,
        out_shape=jax.ShapeDtypeStruct((B, Cout, Np), x.dtype),
        grid_spec=pltpu.PrefetchScalarGridSpec(
            num_scalar_prefetch=0,
            grid=(grid_b,),
            in_specs=[
                pl.BlockSpec((block_b, C, H, W), lambda i: (i, 0, 0, 0)),
                pl.BlockSpec((Cout, KH * KW * Cp), lambda i: (0, 0)),
                pl.BlockSpec((Cout, Np), lambda i: (0, 0)),
            ],
            out_specs=pl.BlockSpec((block_b, Cout, Np), lambda i: (i, 0, 0)),
            scratch_shapes=[
                pltpu.VMEM((block_b, Cp, flat_len), jnp.float32),
                pltpu.VMEM((KH * KW * Cp, Np), jnp.float32),
            ],
        ),
        compiler_params=pltpu.CompilerParams(
            # TODO(synk): on v7x use pltpu.CORE_PARALLEL here to force the
            # 2-TensorCore split; plain "parallel" is kept because it is safe
            # on every generation (v5e/v6e single-TC included).
            dimension_semantics=("parallel",),
            vmem_limit_bytes=32 * 1024 * 1024,
        ),
        cost_estimate=pl.CostEstimate(
            flops=2 * B * Cout * Np * KH * KW * Cp,
            transcendentals=0,
            bytes_accessed=4 * (B * C * H * W + Cout * KH * KW * Cp
                                + Cout * Np + B * Cout * Np),
        ),
    )(x, w_flat, bmap)

    # Strided (B, Cout, Ho*Wp) -> NCHW: contiguous reshape + cheap lane slice.
    return out_strided.reshape(B, Cout, Ho, Wp)[:, :, :, :Wo]


def _reference(x, weight, bias, *, has_radial_dist, padding):
    """Pure-XLA reference matching the PyTorch module."""
    B, C, H, W = x.shape
    xs = jnp.linspace(-1.0, 1.0, H, dtype=x.dtype)
    ys = jnp.linspace(-1.0, 1.0, W, dtype=x.dtype)
    xx = jnp.broadcast_to(xs[None, :, None], (B, H, W))
    yy = jnp.broadcast_to(ys[None, None, :], (B, H, W))
    parts = [x, xx[:, None], yy[:, None]]
    if has_radial_dist:
        parts.append(jnp.sqrt(xx ** 2 + yy ** 2)[:, None])
    coords = jnp.concatenate(parts, axis=1)
    out = lax.conv_general_dilated(
        coords, weight, (1, 1), ((padding, padding), (padding, padding)),
        dimension_numbers=("NCHW", "OIHW", "NCHW"))
    return out + bias[None, :, None, None]


if __name__ == "__main__":
    key = jax.random.PRNGKey(0)
    kx, kw, kb, kx2, kw2, kb2 = jax.random.split(key, 6)

    # Primary config: conv_in_channel=4, conv_out_channel=8,
    # has_radial_dist=True, kernel_size=3, padding=1 (stride=1, bias=True).
    # Default block_b -> 1, grid=(2,)  (>=2 grid steps for the v7x 2-TC split).
    B, C, H, W = 2, 4, 16, 16
    Cout, K, pad = 8, 3, 1
    cin_tot = C + 3
    x = jax.random.normal(kx, (B, C, H, W), dtype=jnp.float32)
    w = jax.random.normal(kw, (Cout, cin_tot, K, K), dtype=jnp.float32) / \
        jnp.sqrt(float(cin_tot * K * K))
    b = 0.1 * jax.random.normal(kb, (Cout,), dtype=jnp.float32)

    fwd = jax.jit(functools.partial(coord_conv_forward,
                                    has_radial_dist=True, padding=pad))
    out = jax.block_until_ready(fwd(x, w, b))
    ref = _reference(x, w, b, has_radial_dist=True, padding=pad)
    assert out.shape == (B, Cout, H, W)
    assert jnp.allclose(out, ref, rtol=1e-4, atol=1e-4), "mismatch (radial case)"

    # Secondary check: batch-blocked path (block_b=2 -> 2 elems per grid step),
    # non-square spatial dims, has_radial_dist=False (module default), Cout=5.
    B2, C2, H2, W2, Cout2 = 4, 3, 12, 20, 5
    cin2 = C2 + 2
    x2 = jax.random.normal(kx2, (B2, C2, H2, W2), dtype=jnp.float32)
    w2 = jax.random.normal(kw2, (Cout2, cin2, K, K), dtype=jnp.float32) / \
        jnp.sqrt(float(cin2 * K * K))
    b2 = 0.1 * jax.random.normal(kb2, (Cout2,), dtype=jnp.float32)
    fwd2 = jax.jit(functools.partial(coord_conv_forward,
                                     has_radial_dist=False, padding=pad,
                                     block_b=2))
    out2 = jax.block_until_ready(fwd2(x2, w2, b2))
    ref2 = _reference(x2, w2, b2, has_radial_dist=False, padding=pad)
    assert out2.shape == (B2, Cout2, H2, W2)
    assert jnp.allclose(out2, ref2, rtol=1e-4, atol=1e-4), "mismatch (blocked batch)"

    print("KERNEL_OK")
</pallas_src>

<mosaic_0001>
module attributes {stable_mosaic.version = 11 : i64} {
  func.func @_coord_conv_kernel(%arg0: i32, %arg1: memref<1x4x16x16xf32, #tpu.memory_space<vmem>>, %arg2: memref<8x72xf32, #tpu.memory_space<vmem>>, %arg3: memref<8x288xf32, #tpu.memory_space<vmem>>, %arg4: memref<1x8x288xf32, #tpu.memory_space<vmem>>, %arg5: memref<1x8x326xf32, #tpu.memory_space<vmem>>, %arg6: memref<72x288xf32, #tpu.memory_space<vmem>>) attributes {dimension_semantics = [#tpu.dimension_semantics<parallel>], iteration_bounds = array<i64: 2>, scalar_prefetch = 0 : i64, scratch_operands = 2 : i64, tpu.core_type = #tpu.core_type<tc>, window_params = [{transform_indices = @transform_0, window_bounds = array<i64: 1, 4, 16, 16>}, {pipeline_mode = #tpu.pipeline_mode<synchronous>, transform_indices = @transform_1, window_bounds = array<i64: 8, 72>}, {pipeline_mode = #tpu.pipeline_mode<synchronous>, transform_indices = @transform_2, window_bounds = array<i64: 8, 288>}, {transform_indices = @transform_3, window_bounds = array<i64: 1, 8, 288>}]} {
    %cst = arith.constant 0.000000e+00 : f32
    %0 = vector.broadcast %cst : f32 to vector<1x8x326xf32>
    %c0 = arith.constant 0 : index
    %c0_0 = arith.constant 0 : index
    %c0_1 = arith.constant 0 : index
    %1 = vector.load %arg5[%c0, %c0_0, %c0_1] : memref<1x8x326xf32, #tpu.memory_space<vmem>>, vector<1x8x326xf32>
    tpu.vector_store %arg5[%c0, %c0_0, %c0_1], %0 {strides = array<i32>} : memref<1x8x326xf32, #tpu.memory_space<vmem>>, vector<1x8x326xf32>,
    %c0_2 = arith.constant 0 : index
    %c0_3 = arith.constant 0 : index
    %c0_4 = arith.constant 0 : index
    %c0_5 = arith.constant 0 : index
    %2 = vector.load %arg1[%c0_2, %c0_3, %c0_4, %c0_5] : memref<1x4x16x16xf32, #tpu.memory_space<vmem>>, vector<1x4x1x16xf32>
    %3 = vector.shape_cast %2 : vector<1x4x1x16xf32> to vector<1x4x16xf32>
    %c0_6 = arith.constant 0 : index
    %c0_7 = arith.constant 0 : index
    %c19 = arith.constant 19 : index
    %4 = vector.load %arg5[%c0_6, %c0_7, %c19] : memref<1x8x326xf32, #tpu.memory_space<vmem>>, vector<1x4x16xf32>
    tpu.vector_store %arg5[%c0_6, %c0_7, %c19], %3 {strides = array<i32>} : memref<1x8x326xf32, #tpu.memory_space<vmem>>, vector<1x4x16xf32>,
    %c0_8 = arith.constant 0 : index
    %c0_9 = arith.constant 0 : index
    %c1 = arith.constant 1 : index
    %c0_10 = arith.constant 0 : index
    %5 = vector.load %arg1[%c0_8, %c0_9, %c1, %c0_10] : memref<1x4x16x16xf32, #tpu.memory_space<vmem>>, vector<1x4x1x16xf32>
    %6 = vector.shape_cast %5 : vector<1x4x1x16xf32> to vector<1x4x16xf32>
    %c0_11 = arith.constant 0 : index
    %c0_12 = arith.constant 0 : index
    %c37 = arith.constant 37 : index
    %7 = vector.load %arg5[%c0_11, %c0_12, %c37] : memref<1x8x326xf32, #tpu.memory_space<vmem>>, vector<1x4x16xf32>
    tpu.vector_store %arg5[%c0_11, %c0_12, %c37], %6 {strides = array<i32>} : memref<1x8x326xf32, #tpu.memory_space<vmem>>, vector<1x4x16xf32>,
    %c0_13 = arith.constant 0 : index
    %c0_14 = arith.constant 0 : index
    %c2 = arith.constant 2 : index
    %c0_15 = arith.constant 0 : index
    %8 = vector.load %arg1[%c0_13, %c0_14, %c2, %c0_15] : memref<1x4x16x16xf32, #tpu.memory_space<vmem>>, vector<1x4x1x16xf32>
    %9 = vector.shape_cast %8 : vector<1x4x1x16xf32> to vector<1x4x16xf32>
    %c0_16 = arith.constant 0 : index
    %c0_17 = arith.constant 0 : index
    %c55 = arith.constant 55 : index
    %10 = vector.load %arg5[%c0_16, %c0_17, %c55] : memref<1x8x326xf32, #tpu.memory_space<vmem>>, vector<1x4x16xf32>
    tpu.vector_store %arg5[%c0_16, %c0_17, %c55], %9 {strides = array<i32>} : memref<1x8x326xf32, #tpu.memory_space<vmem>>, vector<1x4x16xf32>,
    %c0_18 = arith.constant 0 : index
    %c0_19 = arith.constant 0 : index
    %c3 = arith.constant 3 : index
    %c0_20 = arith.constant 0 : index
    %11 = vector.load %arg1[%c0_18, %c0_19, %c3, %c0_20] : memref<1x4x16x16xf32, #tpu.memory_space<vmem>>, vector<1x4x1x16xf32>
    %12 = vector.shape_cast %11 : vector<1x4x1x16xf32> to vector<1x4x16xf32>
    %c0_21 = arith.constant 0 : index
    %c0_22 = arith.constant 0 : index
    %c73 = arith.constant 73 : index
    %13 = vector.load %arg5[%c0_21, %c0_22, %c73] : memref<1x8x326xf32, #tpu.memory_space<vmem>>, vector<1x4x16xf32>
    tpu.vector_store %arg5[%c0_21, %c0_22, %c73], %12 {strides = array<i32>} : memref<1x8x326xf32, #tpu.memory_space<vmem>>, vector<1x4x16xf32>,
    %c0_23 = arith.constant 0 : index
    %c0_24 = arith.constant 0 : index
    %c4 = arith.constant 4 : index
    %c0_25 = arith.constant 0 : index
    %14 = vector.load %arg1[%c0_23, %c0_24, %c4, %c0_25] : memref<1x4x16x16xf32, #tpu.memory_space<vmem>>, vector<1x4x1x16xf32>
    %15 = vector.shape_cast %14 : vector<1x4x1x16xf32> to vector<1x4x16xf32>
    %c0_26 = arith.constant 0 : index
    %c0_27 = arith.constant 0 : index
    %c91 = arith.constant 91 : index
    %16 = vector.load %arg5[%c0_26, %c0_27, %c91] : memref<1x8x326xf32, #tpu.memory_space<vmem>>, vector<1x4x16xf32>
    tpu.vector_store %arg5[%c0_26, %c0_27, %c91], %15 {strides = array<i32>} : memref<1x8x326xf32, #tpu.memory_space<vmem>>, vector<1x4x16xf32>,
    %c0_28 = arith.constant 0 : index
    %c0_29 = arith.constant 0 : index
    %c5 = arith.constant 5 : index
    %c0_30 = arith.constant 0 : index
    %17 = vector.load %arg1[%c0_28, %c0_29, %c5, %c0_30] : memref<1x4x16x16xf32, #tpu.memory_space<vmem>>, vector<1x4x1x16xf32>
    %18 = vector.shape_cast %17 : vector<1x4x1x16xf32> to vector<1x4x16xf32>
    %c0_31 = arith.constant 0 : index
    %c0_32 = arith.constant 0 : index
    %c109 = arith.constant 109 : index
    %19 = vector.load %arg5[%c0_31, %c0_32, %c109] : memref<1x8x326xf32, #tpu.memory_space<vmem>>, vector<1x4x16xf32>
    tpu.vector_store %arg5[%c0_31, %c0_32, %c109], %18 {strides = array<i32>} : memref<1x8x326xf32, #tpu.memory_space<vmem>>, vector<1x4x16xf32>,
    %c0_33 = arith.constant 0 : index
    %c0_34 = arith.constant 0 : index
    %c6 = arith.constant 6 : index
    %c0_35 = arith.constant 0 : index
    %20 = vector.load %arg1[%c0_33, %c0_34, %c6, %c0_35] : memref<1x4x16x16xf32, #tpu.memory_space<vmem>>, vector<1x4x1x16xf32>
    %21 = vector.shape_cast %20 : vector<1x4x1x16xf32> to vector<1x4x16xf32>
    %c0_36 = arith.constant 0 : index
    %c0_37 = arith.constant 0 : index
    %c127 = arith.constant 127 : index
    %22 = vector.load %arg5[%c0_36, %c0_37, %c127] : memref<1x8x326xf32, #tpu.memory_space<vmem>>, vector<1x4x16xf32>
    tpu.vector_store %arg5[%c0_36, %c0_37, %c127], %21 {strides = array<i32>} : memref<1x8x326xf32, #tpu.memory_space<vmem>>, vector<1x4x16xf32>,
    %c0_38 = arith.constant 0 : index
    %c0_39 = arith.constant 0 : index
    %c7 = arith.constant 7 : index
    %c0_40 = arith.constant 0 : index
    %23 = vector.load %arg1[%c0_38, %c0_39, %c7, %c0_40] : memref<1x4x16x16xf32, #tpu.memory_space<vmem>>, vector<1x4x1x16xf32>
    %24 = vector.shape_cast %23 : vector<1x4x1x16xf32> to vector<1x4x16xf32>
    %c0_41 = arith.constant 0 : index
    %c0_42 = arith.constant 0 : index
    %c145 = arith.constant 145 : index
    %25 = vector.load %arg5[%c0_41, %c0_42, %c145] : memref<1x8x326xf32, #tpu.memory_space<vmem>>, vector<1x4x16xf32>
    tpu.vector_store %arg5[%c0_41, %c0_42, %c145], %24 {strides = array<i32>} : memref<1x8x326xf32, #tpu.memory_space<vmem>>, vector<1x4x16xf32>,
    %c0_43 = arith.constant 0 : index
    %c0_44 = arith.constant 0 : index
    %c8 = arith.constant 8 : index
    %c0_45 = arith.constant 0 : index
    %26 = vector.load %arg1[%c0_43, %c0_44, %c8, %c0_45] : memref<1x4x16x16xf32, #tpu.memory_space<vmem>>, vector<1x4x1x16xf32>
    %27 = vector.shape_cast %26 : vector<1x4x1x16xf32> to vector<1x4x16xf32>
    %c0_46 = arith.constant 0 : index
    %c0_47 = arith.constant 0 : index
    %c163 = arith.constant 163 : index
    %28 = vector.load %arg5[%c0_46, %c0_47, %c163] : memref<1x8x326xf32, #tpu.memory_space<vmem>>, vector<1x4x16xf32>
    tpu.vector_store %arg5[%c0_46, %c0_47, %c163], %27 {strides = array<i32>} : memref<1x8x326xf32, #tpu.memory_space<vmem>>, vector<1x4x16xf32>,
    %c0_48 = arith.constant 0 : index
    %c0_49 = arith.constant 0 : index
    %c9 = arith.constant 9 : index
    %c0_50 = arith.constant 0 : index
    %29 = vector.load %arg1[%c0_48, %c0_49, %c9, %c0_50] : memref<1x4x16x16xf32, #tpu.memory_space<vmem>>, vector<1x4x1x16xf32>
    %30 = vector.shape_cast %29 : vector<1x4x1x16xf32> to vector<1x4x16xf32>
    %c0_51 = arith.constant 0 : index
    %c0_52 = arith.constant 0 : index
    %c181 = arith.constant 181 : index
    %31 = vector.load %arg5[%c0_51, %c0_52, %c181] : memref<1x8x326xf32, #tpu.memory_space<vmem>>, vector<1x4x16xf32>
    tpu.vector_store %arg5[%c0_51, %c0_52, %c181], %30 {strides = array<i32>} : memref<1x8x326xf32, #tpu.memory_space<vmem>>, vector<1x4x16xf32>,
    %c0_53 = arith.constant 0 : index
    %c0_54 = arith.constant 0 : index
    %c10 = arith.constant 10 : index
    %c0_55 = arith.constant 0 : index
    %32 = vector.load %arg1[%c0_53, %c0_54, %c10, %c0_55] : memref<1x4x16x16xf32, #tpu.memory_space<vmem>>, vector<1x4x1x16xf32>
    %33 = vector.shape_cast %32 : vector<1x4x1x16xf32> to vector<1x4x16xf32>
    %c0_56 = arith.constant 0 : index
    %c0_57 = arith.constant 0 : index
    %c199 = arith.constant 199 : index
    %34 = vector.load %arg5[%c0_56, %c0_57, %c199] : memref<1x8x326xf32, #tpu.memory_space<vmem>>, vector<1x4x16xf32>
    tpu.vector_store %arg5[%c0_56, %c0_57, %c199], %33 {strides = array<i32>} : memref<1x8x326xf32, #tpu.memory_space<vmem>>, vector<1x4x16xf32>,
    %c0_58 = arith.constant 0 : index
    %c0_59 = arith.constant 0 : index
    %c11 = arith.constant 11 : index
    %c0_60 = arith.constant 0 : index
    %35 = vector.load %arg1[%c0_58, %c0_59, %c11, %c0_60] : memref<1x4x16x16xf32, #tpu.memory_space<vmem>>, vector<1x4x1x16xf32>
    %36 = vector.shape_cast %35 : vector<1x4x1x16xf32> to vector<1x4x16xf32>
    %c0_61 = arith.constant 0 : index
    %c0_62 = arith.constant 0 : index
    %c217 = arith.constant 217 : index
    %37 = vector.load %arg5[%c0_61, %c0_62, %c217] : memref<1x8x326xf32, #tpu.memory_space<vmem>>, vector<1x4x16xf32>
    tpu.vector_store %arg5[%c0_61, %c0_62, %c217], %36 {strides = array<i32>} : memref<1x8x326xf32, #tpu.memory_space<vmem>>, vector<1x4x16xf32>,
    %c0_63 = arith.constant 0 : index
    %c0_64 = arith.constant 0 : index
    %c12 = arith.constant 12 : index
    %c0_65 = arith.constant 0 : index
    %38 = vector.load %arg1[%c0_63, %c0_64, %c12, %c0_65] : memref<1x4x16x16xf32, #tpu.memory_space<vmem>>, vector<1x4x1x16xf32>
    %39 = vector.shape_cast %38 : vector<1x4x1x16xf32> to vector<1x4x16xf32>
    %c0_66 = arith.constant 0 : index
    %c0_67 = arith.constant 0 : index
    %c235 = arith.constant 235 : index
    %40 = vector.load %arg5[%c0_66, %c0_67, %c235] : memref<1x8x326xf32, #tpu.memory_space<vmem>>, vector<1x4x16xf32>
    tpu.vector_store %arg5[%c0_66, %c0_67, %c235], %39 {strides = array<i32>} : memref<1x8x326xf32, #tpu.memory_space<vmem>>, vector<1x4x16xf32>,
    %c0_68 = arith.constant 0 : index
    %c0_69 = arith.constant 0 : index
    %c13 = arith.constant 13 : index
    %c0_70 = arith.constant 0 : index
    %41 = vector.load %arg1[%c0_68, %c0_69, %c13, %c0_70] : memref<1x4x16x16xf32, #tpu.memory_space<vmem>>, vector<1x4x1x16xf32>
    %42 = vector.shape_cast %41 : vector<1x4x1x16xf32> to vector<1x4x16xf32>
    %c0_71 = arith.constant 0 : index
    %c0_72 = arith.constant 0 : index
    %c253 = arith.constant 253 : index
    %43 = vector.load %arg5[%c0_71, %c0_72, %c253] : memref<1x8x326xf32, #tpu.memory_space<vmem>>, vector<1x4x16xf32>
    tpu.vector_store %arg5[%c0_71, %c0_72, %c253], %42 {strides = array<i32>} : memref<1x8x326xf32, #tpu.memory_space<vmem>>, vector<1x4x16xf32>,
    %c0_73 = arith.constant 0 : index
    %c0_74 = arith.constant 0 : index
    %c14 = arith.constant 14 : index
    %c0_75 = arith.constant 0 : index
    %44 = vector.load %arg1[%c0_73, %c0_74, %c14, %c0_75] : memref<1x4x16x16xf32, #tpu.memory_space<vmem>>, vector<1x4x1x16xf32>
    %45 = vector.shape_cast %44 : vector<1x4x1x16xf32> to vector<1x4x16xf32>
    %c0_76 = arith.constant 0 : index
    %c0_77 = arith.constant 0 : index
    %c271 = arith.constant 271 : index
    %46 = vector.load %arg5[%c0_76, %c0_77, %c271] : memref<1x8x326xf32, #tpu.memory_space<vmem>>, vector<1x4x16xf32>
    tpu.vector_store %arg5[%c0_76, %c0_77, %c271], %45 {strides = array<i32>} : memref<1x8x326xf32, #tpu.memory_space<vmem>>, vector<1x4x16xf32>,
    %c0_78 = arith.constant 0 : index
    %c0_79 = arith.constant 0 : index
    %c15 = arith.constant 15 : index
    %c0_80 = arith.constant 0 : index
    %47 = vector.load %arg1[%c0_78, %c0_79, %c15, %c0_80] : memref<1x4x16x16xf32, #tpu.memory_space<vmem>>, vector<1x4x1x16xf32>
    %48 = vector.shape_cast %47 : vector<1x4x1x16xf32> to vector<1x4x16xf32>
    %c0_81 = arith.constant 0 : index
    %c0_82 = arith.constant 0 : index
    %c289 = arith.constant 289 : index
    %49 = vector.load %arg5[%c0_81, %c0_82, %c289] : memref<1x8x326xf32, #tpu.memory_space<vmem>>, vector<1x4x16xf32>
    tpu.vector_store %arg5[%c0_81, %c0_82, %c289], %48 {strides = array<i32>} : memref<1x8x326xf32, #tpu.memory_space<vmem>>, vector<1x4x16xf32>,
    %c0_83 = arith.constant 0 : index
    %c0_84 = arith.constant 0 : index
    %50 = vector.load %arg2[%c0_83, %c0_84] : memref<8x72xf32, #tpu.memory_space<vmem>>, vector<8x72xf32>
    %c0_85 = arith.constant 0 : index
    %c0_86 = arith.constant 0 : index
    %51 = vector.load %arg3[%c0_85, %c0_86] : memref<8x288xf32, #tpu.memory_space<vmem>>, vector<8x288xf32>
    %c0_87 = arith.constant 0 : index
    %c0_88 = arith.constant 0 : index
    %c0_89 = arith.constant 0 : index
    %52 = vector.load %arg5[%c0_87, %c0_88, %c0_89] : memref<1x8x326xf32, #tpu.memory_space<vmem>>, vector<1x8x326xf32>
    %53 = vector.shape_cast %52 : vector<1x8x326xf32> to vector<8x326xf32>
    %54 = vector.extract_strided_slice %53 {offsets = [0, 0], sizes = [8, 288], strides = [1, 1]} : vector<8x326xf32> to vector<8x288xf32>
    %c0_90 = arith.constant 0 : index
    %c0_91 = arith.constant 0 : index
    %55 = vector.load %arg6[%c0_90, %c0_91] : memref<72x288xf32, #tpu.memory_space<vmem>>, vector<8x288xf32>
    tpu.vector_store %arg6[%c0_90, %c0_91], %54 {strides = array<i32>} : memref<72x288xf32, #tpu.memory_space<vmem>>, vector<8x288xf32>,
    %56 = vector.extract_strided_slice %53 {offsets = [0, 1], sizes = [8, 288], strides = [1, 1]} : vector<8x326xf32> to vector<8x288xf32>
    %c8_92 = arith.constant 8 : index
    %c0_93 = arith.constant 0 : index
    %57 = vector.load %arg6[%c8_92, %c0_93] : memref<72x288xf32, #tpu.memory_space<vmem>>, vector<8x288xf32>
    tpu.vector_store %arg6[%c8_92, %c0_93], %56 {strides = array<i32>} : memref<72x288xf32, #tpu.memory_space<vmem>>, vector<8x288xf32>,
    %58 = vector.extract_strided_slice %53 {offsets = [0, 2], sizes = [8, 288], strides = [1, 1]} : vector<8x326xf32> to vector<8x288xf32>
    %c16 = arith.constant 16 : index
    %c0_94 = arith.constant 0 : index
    %59 = vector.load %arg6[%c16, %c0_94] : memref<72x288xf32, #tpu.memory_space<vmem>>, vector<8x288xf32>
    tpu.vector_store %arg6[%c16, %c0_94], %58 {strides = array<i32>} : memref<72x288xf32, #tpu.memory_space<vmem>>, vector<8x288xf32>,
    %60 = vector.extract_strided_slice %53 {offsets = [0, 18], sizes = [8, 288], strides = [1, 1]} : vector<8x326xf32> to vector<8x288xf32>
    %c24 = arith.constant 24 : index
    %c0_95 = arith.constant 0 : index
    %61 = vector.load %arg6[%c24, %c0_95] : memref<72x288xf32, #tpu.memory_space<vmem>>, vector<8x288xf32>
    tpu.vector_store %arg6[%c24, %c0_95], %60 {strides = array<i32>} : memref<72x288xf32, #tpu.memory_space<vmem>>, vector<8x288xf32>,
    %62 = vector.extract_strided_slice %53 {offsets = [0, 19], sizes = [8, 288], strides = [1, 1]} : vector<8x326xf32> to vector<8x288xf32>
    %c32 = arith.constant 32 : index
    %c0_96 = arith.constant 0 : index
    %63 = vector.load %arg6[%c32, %c0_96] : memref<72x288xf32, #tpu.memory_space<vmem>>, vector<8x288xf32>
    tpu.vector_store %arg6[%c32, %c0_96], %62 {strides = array<i32>} : memref<72x288xf32, #tpu.memory_space<vmem>>, vector<8x288xf32>,
    %64 = vector.extract_strided_slice %53 {offsets = [0, 20], sizes = [8, 288], strides = [1, 1]} : vector<8x326xf32> to vector<8x288xf32>
    %c40 = arith.constant 40 : index
    %c0_97 = arith.constant 0 : index
    %65 = vector.load %arg6[%c40, %c0_97] : memref<72x288xf32, #tpu.memory_space<vmem>>, vector<8x288xf32>
    tpu.vector_store %arg6[%c40, %c0_97], %64 {strides = array<i32>} : memref<72x288xf32, #tpu.memory_space<vmem>>, vector<8x288xf32>,
    %66 = vector.extract_strided_slice %53 {offsets = [0, 36], sizes = [8, 288], strides = [1, 1]} : vector<8x326xf32> to vector<8x288xf32>
    %c48 = arith.constant 48 : index
    %c0_98 = arith.constant 0 : index
    %67 = vector.load %arg6[%c48, %c0_98] : memref<72x288xf32, #tpu.memory_space<vmem>>, vector<8x288xf32>
    tpu.vector_store %arg6[%c48, %c0_98], %66 {strides = array<i32>} : memref<72x288xf32, #tpu.memory_space<vmem>>, vector<8x288xf32>,
    %68 = vector.extract_strided_slice %53 {offsets = [0, 37], sizes = [8, 288], strides = [1, 1]} : vector<8x326xf32> to vector<8x288xf32>
    %c56 = arith.constant 56 : index
    %c0_99 = arith.constant 0 : index
    %69 = vector.load %arg6[%c56, %c0_99] : memref<72x288xf32, #tpu.memory_space<vmem>>, vector<8x288xf32>
    tpu.vector_store %arg6[%c56, %c0_99], %68 {strides = array<i32>} : memref<72x288xf32, #tpu.memory_space<vmem>>, vector<8x288xf32>,
    %70 = vector.extract_strided_slice %53 {offsets = [0, 38], sizes = [8, 288], strides = [1, 1]} : vector<8x326xf32> to vector<8x288xf32>
    %c64 = arith.constant 64 : index
    %c0_100 = arith.constant 0 : index
    %71 = vector.load %arg6[%c64, %c0_100] : memref<72x288xf32, #tpu.memory_space<vmem>>, vector<8x288xf32>
    tpu.vector_store %arg6[%c64, %c0_100], %70 {strides = array<i32>} : memref<72x288xf32, #tpu.memory_space<vmem>>, vector<8x288xf32>,
    %c0_101 = arith.constant 0 : index
    %c0_102 = arith.constant 0 : index
    %72 = vector.load %arg6[%c0_101, %c0_102] : memref<72x288xf32, #tpu.memory_space<vmem>>, vector<72x288xf32>
    %cst_103 = arith.constant dense<0.000000e+00> : vector<8x288xf32>
    %73 = tpu.matmul %50, %72, %cst_103 {dimension_numbers = #tpu.dot_dimension_numbers<[1], [0], [0], [1], [0, 0, 1, 1], [], []>} : vector<8x72xf32>, vector<72x288xf32>, vector<8x288xf32> -> vector<8x288xf32>
    %74 = arith.addf %73, %51 : vector<8x288xf32>
    %c0_104 = arith.constant 0 : index
    %c0_105 = arith.constant 0 : index
    %c0_106 = arith.constant 0 : index
    %75 = vector.load %arg4[%c0_104, %c0_105, %c0_106] : memref<1x8x288xf32, #tpu.memory_space<vmem>>, vector<1x8x288xf32>
    %76 = vector.shape_cast %75 : vector<1x8x288xf32> to vector<8x288xf32>
    %77 = vector.shape_cast %74 : vector<8x288xf32> to vector<1x8x288xf32>
    tpu.vector_store %arg4[%c0_104, %c0_105, %c0_106], %77 {strides = array<i32>} : memref<1x8x288xf32, #tpu.memory_space<vmem>>, vector<1x8x288xf32>,
    return
  }
  func.func @transform_0(%arg0: i32) -> (i32, i32, i32, i32) {
    %c0_i32 = arith.constant 0 : i32
    %c0_i32_0 = arith.constant 0 : i32
    %c0_i32_1 = arith.constant 0 : i32
    %c0_i32_2 = arith.constant 0 : i32
    return %arg0, %c0_i32, %c0_i32_0, %c0_i32_1 : i32, i32, i32, i32
  }
  func.func @transform_1(%arg0: i32) -> (i32, i32) {
    %c0_i32 = arith.constant 0 : i32
    %c0_i32_0 = arith.constant 0 : i32
    %c0_i32_1 = arith.constant 0 : i32
    return %c0_i32, %c0_i32_0 : i32, i32
  }
  func.func @transform_2(%arg0: i32) -> (i32, i32) {
    %c0_i32 = arith.constant 0 : i32
    %c0_i32_0 = arith.constant 0 : i32
    %c0_i32_1 = arith.constant 0 : i32
    return %c0_i32, %c0_i32_0 : i32, i32
  }
  func.func @transform_3(%arg0: i32) -> (i32, i32, i32) {
    %c0_i32 = arith.constant 0 : i32
    %c0_i32_0 = arith.constant 0 : i32
    %c0_i32_1 = arith.constant 0 : i32
    return %arg0, %c0_i32, %c0_i32_0 : i32, i32, i32
  }
}

</mosaic_0001>

<llo_original>
// kernel: coord_conv_forward.1
$region0: #{coord_conv_forward.1}
  #allocation0 [shape = 'u32[]', space=smem, size = 0x4, offset = 0x4, fixed_abs, tag = 'smem constant byte address 0x4 - core index']
  #allocation1 [shape = 'u32[144,128]{1,0:T(1,128)}', space=vmem, size = 0x12000, scoped, tag = 'internal scratch']
  #allocation2 [shape = 'f32[1,8,326]{2,1,0:T(8,128)}', space=vmem, size = 0x3000, scoped, tag = 'scratch operand']
  #allocation3 [shape = 'f32[72,288]{1,0:T(8,128)}', space=vmem, size = 0x1b000, scoped, tag = 'scratch operand']
  %s0 = inlined_call_operand.vmem [shape: f32[2,4,16,16], index: 0, kind: input, shape index: {}]
  %s1 = inlined_call_operand.vmem [shape: f32[8,72], index: 1, kind: input, shape index: {}]
  %s2 = inlined_call_operand.vmem [shape: f32[8,288], index: 2, kind: input, shape index: {}]
  %s3 = inlined_call_operand.vmem [shape: f32[2,8,288], index: 3, kind: output, shape index: {}]
  %s4 = sld [smem:[#allocation0]]
  $region45: #{coord_conv_forward.1} parent=0
    _
  %s6 = ssub.s32 1, %s4
  %s7 = scalar_select 0, %s6, %s4
  loop: start=0, step=1, limit=4
  $region2: #{coord_conv_forward.1} parent=0 // loop_pre_header
    _
  $region3: #{coord_conv_forward.1} parent=0 // loop_header
    %s9 = sphi 0, %s13
    %p10 = scmp.ge.s32.totalorder %s9, 4
    %s19 = sphi 0, %s21
    %s22 = sphi 0, %s19
    %s23 = sphi 0, %s22
    %s39 = sphi 0, %s23
    %s43 = sphi 0, %s43
    %s45 = sphi 0, %s43
    %s46 = sphi 0, %s45
    %s60 = sphi 0, %s46
    %s64 = sphi 0, %s64
    %s66 = sphi 0, %s64
    %s67 = sphi 0, %s66
    %s81 = sphi 0, %s67
    %s87 = sphi 0, %s89
    %s90 = sphi 0, %s87
    %s91 = sphi 0, %s90
    %s107 = sphi 0, %s91
  $region4: #{coord_conv_forward.1} parent=0 // loop_header_branch
    %12 = sbr.rel (%p10) target = $region8
  $region5: #{coord_conv_forward.1} parent=0 // loop_body
    %s14 = ssub.s32 %s9, 1
    %s15 = ssub.s32 %s9, 2
    %s16 = sadd.s32 %s9, 1
    %s17 = ssub.s32 %s9, %s16
    %p18 = scmp.eq.s32.totalorder %s17, 0
    %s20 = sadd.s32 %s19, 1
    %s21 = scalar_select %p18, %s19, %s20
    %p24 = pneg %p18
    %p25 = scmp.eq.s32.totalorder %s9, 1
    %p26 = por %p24, %p25
    %p27 = scmp.ne.s32.totalorder %s19, %s22
    %p28 = scmp.eq.s32.totalorder %s9, 0
    %p29 = por %p27, %p28
    %p30 = scmp.ne.s32.totalorder %s19, %s22
    %p31 = scmp.eq.s32.totalorder %s14, 1
    %p32 = por %p30, %p31
    %p33 = scmp.ne.s32.totalorder %s22, %s23
    %p34 = scmp.eq.s32.totalorder %s14, 0
    %p35 = por %p33, %p34
    %p36 = scmp.ne.s32.totalorder %s22, %s23
    %p37 = scmp.eq.s32.totalorder %s15, 1
    %p38 = por %p36, %p37
    %p40 = scmp.ne.s32.totalorder %s23, %s39
    %p41 = scmp.eq.s32.totalorder %s15, 0
    %p42 = por %p40, %p41
    %s44 = sadd.s32 %s43, 1
    %p47 = scmp.eq.s32.totalorder %s9, 1
    %p48 = scmp.ne.s32.totalorder %s43, %s45
    %p49 = scmp.eq.s32.totalorder %s9, 0
    %p50 = por %p48, %p49
    %p51 = scmp.ne.s32.totalorder %s43, %s45
    %p52 = scmp.eq.s32.totalorder %s14, 1
    %p53 = por %p51, %p52
    %p54 = scmp.ne.s32.totalorder %s45, %s46
    %p55 = scmp.eq.s32.totalorder %s14, 0
    %p56 = por %p54, %p55
    %p57 = scmp.ne.s32.totalorder %s45, %s46
    %p58 = scmp.eq.s32.totalorder %s15, 1
    %p59 = por %p57, %p58
    %p61 = scmp.ne.s32.totalorder %s46, %s60
    %p62 = scmp.eq.s32.totalorder %s15, 0
    %p63 = por %p61, %p62
    %s65 = sadd.s32 %s64, 1
    %p68 = scmp.eq.s32.totalorder %s9, 1
    %p69 = scmp.ne.s32.totalorder %s64, %s66
    %p70 = scmp.eq.s32.totalorder %s9, 0
    %p71 = por %p69, %p70
    %p72 = scmp.ne.s32.totalorder %s64, %s66
    %p73 = scmp.eq.s32.totalorder %s14, 1
    %p74 = por %p72, %p73
    %p75 = scmp.ne.s32.totalorder %s66, %s67
    %p76 = scmp.eq.s32.totalorder %s14, 0
    %p77 = por %p75, %p76
    %p78 = scmp.ne.s32.totalorder %s66, %s67
    %p79 = scmp.eq.s32.totalorder %s15, 1
    %p80 = por %p78, %p79
    %p82 = scmp.ne.s32.totalorder %s67, %s81
    %p83 = scmp.eq.s32.totalorder %s15, 0
    %p84 = por %p82, %p83
    %s85 = ssub.s32 %s9, %s16
    %p86 = scmp.eq.s32.totalorder %s85, 0
    %s88 = sadd.s32 %s87, 1
    %s89 = scalar_select %p86, %s87, %s88
    %p92 = pneg %p86
    %p93 = scmp.eq.s32.totalorder %s9, 1
    %p94 = por %p92, %p93
    %p95 = scmp.ne.s32.totalorder %s87, %s90
    %p96 = scmp.eq.s32.totalorder %s9, 0
    %p97 = por %p95, %p96
    %p98 = scmp.ne.s32.totalorder %s87, %s90
    %p99 = scmp.eq.s32.totalorder %s14, 1
    %p100 = por %p98, %p99
    %p101 = scmp.ne.s32.totalorder %s90, %s91
    %p102 = scmp.eq.s32.totalorder %s14, 0
    %p103 = por %p101, %p102
    %p104 = scmp.ne.s32.totalorder %s90, %s91
    %p105 = scmp.eq.s32.totalorder %s15, 1
    %p106 = por %p104, %p105
    %p108 = scmp.ne.s32.totalorder %s91, %s107
    %p109 = scmp.eq.s32.totalorder %s15, 0
    %p110 = por %p108, %p109
    %p111 = scmp.le.s32.totalorder 1, %s9
    %p112 = scmp.lt.s32.totalorder %s9, 3
    %p113 = pnand %p111, %p112
    %p114 = pneg %p113
    // Predicated region
    $region9: #{coord_conv_forward.1} parent=5 // pred_check
      _
    $region10: #{coord_conv_forward.1} parent=5 // pred_check_branch
      %116 = sbr.rel (%p113) target = $region12
    $region11: #{coord_conv_forward.1} parent=5 // pred_region
      %s117 = ssub.s32 %s9, 1
      // Predicated region
      $region13: #{coord_conv_forward.1} parent=11 // pred_check
        %p118 = pneg %p56
      $region14: #{coord_conv_forward.1} parent=11 // pred_check_branch
        %120 = sbr.rel (%p118) target = $region16
      $region15: #{coord_conv_forward.1} parent=11 // pred_region
        _
      $region16: #{coord_conv_forward.1} parent=11 // pred_fallthru
        _
      // Predicated region
      $region17: #{coord_conv_forward.1} parent=11 // pred_check
        %p121 = pneg %p77
      $region18: #{coord_conv_forward.1} parent=11 // pred_check_branch
        %123 = sbr.rel (%p121) target = $region20
      $region19: #{coord_conv_forward.1} parent=11 // pred_region
        _
      $region20: #{coord_conv_forward.1} parent=11 // pred_fallthru
        _
    $region12: #{coord_conv_forward.1} parent=5 // pred_fallthru
      _
    %p124 = scmp.lt.s32.totalorder %s9, 2
    // Predicated region
    $region21: #{coord_conv_forward.1} parent=5 // pred_check
      %p125 = pneg %p124
    $region22: #{coord_conv_forward.1} parent=5 // pred_check_branch
      %127 = sbr.rel (%p125) target = $region24
    $region23: #{coord_conv_forward.1} parent=5 // pred_region
      // Predicated region
      $region25: #{coord_conv_forward.1} parent=23 // pred_check
        %p128 = pneg %p29
      $region26: #{coord_conv_forward.1} parent=23 // pred_check_branch
        %130 = sbr.rel (%p128) target = $region28
      $region27: #{coord_conv_forward.1} parent=23 // pred_region
        %p131 = scmp.lt.s32.totalorder %s9, 1
        %s132 = scalar_select %p131, %s9, 1
        %s133 = smul.addr %s132, 8
        %s134 = smul.addr %s133, 8
        %s135 = scalar_lea.vmem %s0, %s134
      $region28: #{coord_conv_forward.1} parent=23 // pred_fallthru
        _
    $region24: #{coord_conv_forward.1} parent=5 // pred_fallthru
      _
    %p136 = scmp.le.s32.totalorder 1, %s9
    %p137 = scmp.lt.s32.totalorder %s9, 3
    %p138 = pnand %p136, %p137
    %p139 = pneg %p138
    // Predicated region
    $region29: #{coord_conv_forward.1} parent=5 // pred_check
      _
    $region30: #{coord_conv_forward.1} parent=5 // pred_check_branch
      %141 = sbr.rel (%p138) target = $region32
    $region31: #{coord_conv_forward.1} parent=5 // pred_region
      %s142 = ssub.s32 %s9, 1
      %p143 = scmp.lt.s32.totalorder %s14, 1
      %s144 = scalar_select %p143, %s14, 1
      %s145 = smul.addr %s144, 8
      %s146 = smul.addr %s145, 8
      %s147 = scalar_lea.vmem %s0, %s146
      %p148 = pneg %p35
      %p149 = pneg %p32
      %p150 = pneg %p56
      %p151 = pneg %p53
      %p152 = pneg %p77
      %p153 = pneg %p74
      %p154 = pneg %p103
      %p155 = pneg %p100
      %p156 = scmp.lt.s32.totalorder %s14, 1
      %s157 = scalar_select %p156, %s14, 1
      %s158 = smul.addr %s157, 3
      %s159 = smul.addr %s158, 8
      %s160 = scalar_lea.vmem %s3, %s159
      %p161 = scmp.lt.s32.totalorder %s14, 1
      %s162 = scalar_select %p161, %s14, 1
      %s163 = smul.addr %s162, 8
      %s164 = smul.addr %s163, 8
      %s165 = scalar_lea.vmem %s0, %s164
      %p166 = scmp.lt.s32.totalorder %s14, 1
      %s167 = scalar_select %p166, %s14, 1
      %s168 = smul.addr %s167, 3
      %s169 = smul.addr %s168, 8
      %s170 = scalar_lea.vmem %s3, %s169
      %171 = vst [vmem:[#allocation2] sm:$0xff] 0.0
      %172 = vst [vmem:[#allocation2 + $0x8] sm:$0xff] 0.0
      %vm173 = vcmask 572416
      %174 = vst.msk [vmem:[#allocation2 + $0x10] sm:$0xff] %vm173, 0.0
      %v175 = vld [vmem:[%s165] sm:$0x1]
      %v176 = vld [vmem:[%s165 + $0x10] sm:$0x1]
      %v177 = vld [vmem:[%s165 + $0x20] sm:$0x1]
      %v178 = vld [vmem:[%s165 + $0x30] sm:$0x1]
      %v183 = vrot.slane %v176, 7
      %vm184 = vcmask 1041409
      %v185 = vsel %vm184, %v183, %v175
      %v186 = vrot.slane %v177, 6
      %vm187 = vcmask 1042434
      %v188 = vsel %vm187, %v186, %v185
      %v189 = vrot.slane %v178, 5
      %vm190 = vcmask 1043459
      %v191 = vsel %vm190, %v189, %v188
      %192 = vrot.lane.b32.xlu0 %v191, 19
      %v193 = vpop.permute.xlu0 %192
      %vm195 = vcmask 281752
      %196 = vst.msk [vmem:[#allocation2] sm:$0xf] %vm195, %v193
      %v197 = vld [vmem:[%s165 + $0x1] sm:$0x1]
      %v198 = vld [vmem:[%s165 + $0x11] sm:$0x1]
      %v199 = vld [vmem:[%s165 + $0x21] sm:$0x1]
      %v200 = vld [vmem:[%s165 + $0x31] sm:$0x1]
      %v205 = vrot.slane %v198, 7
      %v206 = vsel %vm184, %v205, %v197
      %v207 = vrot.slane %v199, 6
      %v208 = vsel %vm187, %v207, %v206
      %v209 = vrot.slane %v200, 5
      %v210 = vsel %vm190, %v209, %v208
      %211 = vrot.lane.b32.xlu0 %v210, 37
      %v212 = vpop.permute.xlu0 %211
      %vm214 = vcmask 429352
      %215 = vst.msk [vmem:[#allocation2] sm:$0xf] %vm214, %v212
      %v216 = vld [vmem:[%s165 + $0x2] sm:$0x1]
      %v217 = vld [vmem:[%s165 + $0x12] sm:$0x1]
      %v218 = vld [vmem:[%s165 + $0x22] sm:$0x1]
      %v219 = vld [vmem:[%s165 + $0x32] sm:$0x1]
      %v224 = vrot.slane %v217, 7
      %v225 = vsel %vm184, %v224, %v216
      %v226 = vrot.slane %v218, 6
      %v227 = vsel %vm187, %v226, %v225
      %v228 = vrot.slane %v219, 5
      %v229 = vsel %vm190, %v228, %v227
      %230 = vrot.lane.b32.xlu0 %v229, 55
      %v231 = vpop.permute.xlu0 %230
      %vm233 = vcmask 576952
      %234 = vst.msk [vmem:[#allocation2] sm:$0xf] %vm233, %v231
      %v235 = vld [vmem:[%s165 + $0x3] sm:$0x1]
      %v236 = vld [vmem:[%s165 + $0x13] sm:$0x1]
      %v237 = vld [vmem:[%s165 + $0x23] sm:$0x1]
      %v238 = vld [vmem:[%s165 + $0x33] sm:$0x1]
      %v243 = vrot.slane %v236, 7
      %v244 = vsel %vm184, %v243, %v235
      %v245 = vrot.slane %v237, 6
      %v246 = vsel %vm187, %v245, %v244
      %v247 = vrot.slane %v238, 5
      %v248 = vsel %vm190, %v247, %v246
      %249 = vrot.lane.b32.xlu0 %v248, 73
      %v250 = vpop.permute.xlu0 %249
      %vm252 = vcmask 724552
      %253 = vst.msk [vmem:[#allocation2] sm:$0xf] %vm252, %v250
      %v254 = vld [vmem:[%s165 + $0x4] sm:$0x1]
      %v255 = vld [vmem:[%s165 + $0x14] sm:$0x1]
      %v256 = vld [vmem:[%s165 + $0x24] sm:$0x1]
      %v257 = vld [vmem:[%s165 + $0x34] sm:$0x1]
      %v262 = vrot.slane %v255, 7
      %v263 = vsel %vm184, %v262, %v254
      %v264 = vrot.slane %v256, 6
      %v265 = vsel %vm187, %v264, %v263
      %v266 = vrot.slane %v257, 5
      %v267 = vsel %vm190, %v266, %v265
      %268 = vrot.lane.b32.xlu0 %v267, 91
      %v269 = vpop.permute.xlu0 %268
      %vm271 = vcmask 872152
      %272 = vst.msk [vmem:[#allocation2] sm:$0xf] %vm271, %v269
      %v273 = vld [vmem:[%s165 + $0x5] sm:$0x1]
      %v274 = vld [vmem:[%s165 + $0x15] sm:$0x1]
      %v275 = vld [vmem:[%s165 + $0x25] sm:$0x1]
      %v276 = vld [vmem:[%s165 + $0x35] sm:$0x1]
      %v281 = vrot.slane %v274, 7
      %v282 = vsel %vm184, %v281, %v273
      %v283 = vrot.slane %v275, 6
      %v284 = vsel %vm187, %v283, %v282
      %v285 = vrot.slane %v276, 5
      %v286 = vsel %vm190, %v285, %v284
      %287 = vrot.lane.b32.xlu0 %v286, 109
      %v288 = vpop.permute.xlu0 %287
      %vm290 = vcmask 1019752
      %291 = vst.msk [vmem:[#allocation2] sm:$0xf] %vm290, %v288
      %v292 = vld [vmem:[%s165 + $0x6] sm:$0x1]
      %v293 = vld [vmem:[%s165 + $0x16] sm:$0x1]
      %v294 = vld [vmem:[%s165 + $0x26] sm:$0x1]
      %v295 = vld [vmem:[%s165 + $0x36] sm:$0x1]
      %v300 = vrot.slane %v293, 7
      %v301 = vsel %vm184, %v300, %v292
      %v302 = vrot.slane %v294, 6
      %v303 = vsel %vm187, %v302, %v301
      %v304 = vrot.slane %v295, 5
      %v305 = vsel %vm190, %v304, %v303
      %306 = vrot.lane.b32.xlu0 %v305, 127
      %v307 = vpop.permute.xlu0 %306
      %vm309 = vcmask 1044472
      %310 = vst.msk [vmem:[#allocation2] sm:$0xf] %vm309, %v307
      %vm311 = vcmask 117760
      %312 = vst.msk [vmem:[#allocation2 + $0x8] sm:$0xf] %vm311, %v307
      %v313 = vld [vmem:[%s165 + $0x7] sm:$0x1]
      %v314 = vld [vmem:[%s165 + $0x17] sm:$0x1]
      %v315 = vld [vmem:[%s165 + $0x27] sm:$0x1]
      %v316 = vld [vmem:[%s165 + $0x37] sm:$0x1]
      %v321 = vrot.slane %v314, 7
      %v322 = vsel %vm184, %v321, %v313
      %v323 = vrot.slane %v315, 6
      %v324 = vsel %vm187, %v323, %v322
      %v325 = vrot.slane %v316, 5
      %v326 = vsel %vm190, %v325, %v324
      %327 = vrot.lane.b32.xlu0 %v326, 17
      %v328 = vpop.permute.xlu0 %327
      %vm330 = vcmask 265352
      %331 = vst.msk [vmem:[#allocation2 + $0x8] sm:$0xf] %vm330, %v328
      %v332 = vld [vmem:[%s165 + $0x8] sm:$0x1]
      %v333 = vld [vmem:[%s165 + $0x18] sm:$0x1]
      %v334 = vld [vmem:[%s165 + $0x28] sm:$0x1]
      %v335 = vld [vmem:[%s165 + $0x38] sm:$0x1]
      %v340 = vrot.slane %v333, 7
      %v341 = vsel %vm184, %v340, %v332
      %v342 = vrot.slane %v334, 6
      %v343 = vsel %vm187, %v342, %v341
      %v344 = vrot.slane %v335, 5
      %v345 = vsel %vm190, %v344, %v343
      %346 = vrot.lane.b32.xlu0 %v345, 35
      %v347 = vpop.permute.xlu0 %346
      %vm349 = vcmask 412952
      %350 = vst.msk [vmem:[#allocation2 + $0x8] sm:$0xf] %vm349, %v347
      %v351 = vld [vmem:[%s165 + $0x9] sm:$0x1]
      %v352 = vld [vmem:[%s165 + $0x19] sm:$0x1]
      %v353 = vld [vmem:[%s165 + $0x29] sm:$0x1]
      %v354 = vld [vmem:[%s165 + $0x39] sm:$0x1]
      %v359 = vrot.slane %v352, 7
      %v360 = vsel %vm184, %v359, %v351
      %v361 = vrot.slane %v353, 6
      %v362 = vsel %vm187, %v361, %v360
      %v363 = vrot.slane %v354, 5
      %v364 = vsel %vm190, %v363, %v362
      %365 = vrot.lane.b32.xlu0 %v364, 53
      %v366 = vpop.permute.xlu0 %365
      %vm368 = vcmask 560552
      %369 = vst.msk [vmem:[#allocation2 + $0x8] sm:$0xf] %vm368, %v366
      %v370 = vld [vmem:[%s165 + $0xa] sm:$0x1]
      %v371 = vld [vmem:[%s165 + $0x1a] sm:$0x1]
      %v372 = vld [vmem:[%s165 + $0x2a] sm:$0x1]
      %v373 = vld [vmem:[%s165 + $0x3a] sm:$0x1]
      %v378 = vrot.slane %v371, 7
      %v379 = vsel %vm184, %v378, %v370
      %v380 = vrot.slane %v372, 6
      %v381 = vsel %vm187, %v380, %v379
      %v382 = vrot.slane %v373, 5
      %v383 = vsel %vm190, %v382, %v381
      %384 = vrot.lane.b32.xlu0 %v383, 71
      %v385 = vpop.permute.xlu0 %384
      %vm387 = vcmask 708152
      %388 = vst.msk [vmem:[#allocation2 + $0x8] sm:$0xf] %vm387, %v385
      %v389 = vld [vmem:[%s165 + $0xb] sm:$0x1]
      %v390 = vld [vmem:[%s165 + $0x1b] sm:$0x1]
      %v391 = vld [vmem:[%s165 + $0x2b] sm:$0x1]
      %v392 = vld [vmem:[%s165 + $0x3b] sm:$0x1]
      %v397 = vrot.slane %v390, 7
      %v398 = vsel %vm184, %v397, %v389
      %v399 = vrot.slane %v391, 6
      %v400 = vsel %vm187, %v399, %v398
      %v401 = vrot.slane %v392, 5
      %v402 = vsel %vm190, %v401, %v400
      %403 = vrot.lane.b32.xlu0 %v402, 89
      %v404 = vpop.permute.xlu0 %403
      %vm406 = vcmask 855752
      %407 = vst.msk [vmem:[#allocation2 + $0x8] sm:$0xf] %vm406, %v404
      %v408 = vld [vmem:[%s165 + $0xc] sm:$0x1]
      %v409 = vld [vmem:[%s165 + $0x1c] sm:$0x1]
      %v410 = vld [vmem:[%s165 + $0x2c] sm:$0x1]
      %v411 = vld [vmem:[%s165 + $0x3c] sm:$0x1]
      %v416 = vrot.slane %v409, 7
      %v417 = vsel %vm184, %v416, %v408
      %v418 = vrot.slane %v410, 6
      %v419 = vsel %vm187, %v418, %v417
      %v420 = vrot.slane %v411, 5
      %v421 = vsel %vm190, %v420, %v419
      %422 = vrot.lane.b32.xlu0 %v421, 107
      %v423 = vpop.permute.xlu0 %422
      %vm425 = vcmask 1003352
      %426 = vst.msk [vmem:[#allocation2 + $0x8] sm:$0xf] %vm425, %v423
      %v427 = vld [vmem:[%s165 + $0xd] sm:$0x1]
      %v428 = vld [vmem:[%s165 + $0x1d] sm:$0x1]
      %v429 = vld [vmem:[%s165 + $0x2d] sm:$0x1]
      %v430 = vld [vmem:[%s165 + $0x3d] sm:$0x1]
      %v435 = vrot.slane %v428, 7
      %v436 = vsel %vm184, %v435, %v427
      %v437 = vrot.slane %v429, 6
      %v438 = vsel %vm187, %v437, %v436
      %v439 = vrot.slane %v430, 5
      %v440 = vsel %vm190, %v439, %v438
      %441 = vrot.lane.b32.xlu0 %v440, 125
      %v442 = vpop.permute.xlu0 %441
      %vm444 = vcmask 1044456
      %445 = vst.msk [vmem:[#allocation2 + $0x8] sm:$0xf] %vm444, %v442
      %vm446 = vcmask 101376
      %447 = vst.msk [vmem:[#allocation2 + $0x10] sm:$0xf] %vm446, %v442
      %v448 = vld [vmem:[%s165 + $0xe] sm:$0x1]
      %v449 = vld [vmem:[%s165 + $0x1e] sm:$0x1]
      %v450 = vld [vmem:[%s165 + $0x2e] sm:$0x1]
      %v451 = vld [vmem:[%s165 + $0x3e] sm:$0x1]
      %v456 = vrot.slane %v449, 7
      %v457 = vsel %vm184, %v456, %v448
      %v458 = vrot.slane %v450, 6
      %v459 = vsel %vm187, %v458, %v457
      %v460 = vrot.slane %v451, 5
      %v461 = vsel %vm190, %v460, %v459
      %462 = vrot.lane.b32.xlu0 %v461, 15
      %v463 = vpop.permute.xlu0 %462
      %vm465 = vcmask 248952
      %466 = vst.msk [vmem:[#allocation2 + $0x10] sm:$0xf] %vm465, %v463
      %v467 = vld [vmem:[%s165 + $0xf] sm:$0x1]
      %v468 = vld [vmem:[%s165 + $0x1f] sm:$0x1]
      %v469 = vld [vmem:[%s165 + $0x2f] sm:$0x1]
      %v470 = vld [vmem:[%s165 + $0x3f] sm:$0x1]
      %v475 = vrot.slane %v468, 7
      %v476 = vsel %vm184, %v475, %v467
      %v477 = vrot.slane %v469, 6
      %v478 = vsel %vm187, %v477, %v476
      %v479 = vrot.slane %v470, 5
      %v480 = vsel %vm190, %v479, %v478
      %481 = vrot.lane.b32.xlu0 %v480, 33
      %v482 = vpop.permute.xlu0 %481
      %vm484 = vcmask 396552
      %485 = vst.msk [vmem:[#allocation2 + $0x10] sm:$0xf] %vm484, %v482
      %v486 = vld [vmem:[%s1] sm:$0xff]
      %v487 = vld [vmem:[%s2] sm:$0xff]
      %v488 = vld [vmem:[%s2 + $0x8] sm:$0xff]
      %v489 = vld [vmem:[%s2 + $0x10] sm:$0xff]
      %v490 = vld [vmem:[#allocation2] sm:$0xff]
      %v491 = vld [vmem:[#allocation2 + $0x8] sm:$0xff]
      %v492 = vld [vmem:[#allocation2 + $0x10] sm:$0xff]
      %493 = vst [vmem:[#allocation3] sm:$0xff] %v490
      %494 = vst [vmem:[#allocation3 + $0x8] sm:$0xff] %v491
      %vm495 = vcmask 261120
      %496 = vst.msk [vmem:[#allocation3 + $0x10] sm:$0xff] %vm495, %v492
      %500 = vrot.lane.b32.xlu0 %v490, 127
      %v501 = vpop.permute.xlu0 %500
      %502 = vrot.lane.b32.xlu0 %v491, 127
      %v503 = vpop.permute.xlu0 %502
      %504 = vrot.lane.b32.xlu0 %v492, 127
      %v505 = vpop.permute.xlu0 %504
      %vm506 = vcmask 1039360
      %v507 = vsel %vm506, %v501, %v503
      %v508 = vsel %vm506, %v503, %v505
      %512 = vst [vmem:[#allocation3 + $0x18] sm:$0xff] %v507
      %513 = vst [vmem:[#allocation3 + $0x20] sm:$0xff] %v508
      %514 = vst.msk [vmem:[#allocation3 + $0x28] sm:$0xff] %vm495, %v505
      %515 = vrot.lane.b32.xlu0 %v490, 126
      %v516 = vpop.permute.xlu0 %515
      %517 = vrot.lane.b32.xlu0 %v491, 126
      %v518 = vpop.permute.xlu0 %517
      %519 = vrot.lane.b32.xlu0 %v492, 126
      %v520 = vpop.permute.xlu0 %519
      %vm521 = vcmask 1031168
      %v522 = vsel %vm521, %v516, %v518
      %v523 = vsel %vm521, %v518, %v520
      %527 = vst [vmem:[#allocation3 + $0x30] sm:$0xff] %v522
      %528 = vst [vmem:[#allocation3 + $0x38] sm:$0xff] %v523
      %529 = vst.msk [vmem:[#allocation3 + $0x40] sm:$0xff] %vm495, %v520
      %530 = vrot.lane.b32.xlu0 %v490, 110
      %v531 = vpop.permute.xlu0 %530
      %532 = vrot.lane.b32.xlu0 %v491, 110
      %v533 = vpop.permute.xlu0 %532
      %534 = vrot.lane.b32.xlu0 %v492, 110
      %v535 = vpop.permute.xlu0 %534
      %vm536 = vcmask 900096
      %v537 = vsel %vm536, %v531, %v533
      %v538 = vsel %vm536, %v533, %v535
      %542 = vst [vmem:[#allocation3 + $0x48] sm:$0xff] %v537
      %543 = vst [vmem:[#allocation3 + $0x50] sm:$0xff] %v538
      %544 = vst.msk [vmem:[#allocation3 + $0x58] sm:$0xff] %vm495, %v535
      %545 = vrot.lane.b32.xlu0 %v490, 109
      %v546 = vpop.permute.xlu0 %545
      %547 = vrot.lane.b32.xlu0 %v491, 109
      %v548 = vpop.permute.xlu0 %547
      %549 = vrot.lane.b32.xlu0 %v492, 109
      %v550 = vpop.permute.xlu0 %549
      %vm551 = vcmask 891904
      %v552 = vsel %vm551, %v546, %v548
      %v553 = vsel %vm551, %v548, %v550
      %557 = vst [vmem:[#allocation3 + $0x60] sm:$0xff] %v552
      %558 = vst [vmem:[#allocation3 + $0x68] sm:$0xff] %v553
      %559 = vst.msk [vmem:[#allocation3 + $0x70] sm:$0xff] %vm495, %v550
      %560 = vrot.lane.b32.xlu0 %v490, 108
      %v561 = vpop.permute.xlu0 %560
      %562 = vrot.lane.b32.xlu0 %v491, 108
      %v563 = vpop.permute.xlu0 %562
      %564 = vrot.lane.b32.xlu0 %v492, 108
      %v565 = vpop.permute.xlu0 %564
      %vm566 = vcmask 883712
      %v567 = vsel %vm566, %v561, %v563
      %v568 = vsel %vm566, %v563, %v565
      %572 = vst [vmem:[#allocation3 + $0x78] sm:$0xff] %v567
      %573 = vst [vmem:[#allocation3 + $0x80] sm:$0xff] %v568
      %574 = vst.msk [vmem:[#allocation3 + $0x88] sm:$0xff] %vm495, %v565
      %575 = vrot.lane.b32.xlu0 %v490, 92
      %v576 = vpop.permute.xlu0 %575
      %577 = vrot.lane.b32.xlu0 %v491, 92
      %v578 = vpop.permute.xlu0 %577
      %579 = vrot.lane.b32.xlu0 %v492, 92
      %v580 = vpop.permute.xlu0 %579
      %vm581 = vcmask 752640
      %v582 = vsel %vm581, %v576, %v578
      %v583 = vsel %vm581, %v578, %v580
      %587 = vst [vmem:[#allocation3 + $0x90] sm:$0xff] %v582
      %588 = vst [vmem:[#allocation3 + $0x98] sm:$0xff] %v583
      %589 = vst.msk [vmem:[#allocation3 + $0xa0] sm:$0xff] %vm495, %v580
      %590 = vrot.lane.b32.xlu0 %v490, 91
      %v591 = vpop.permute.xlu0 %590
      %592 = vrot.lane.b32.xlu0 %v491, 91
      %v593 = vpop.permute.xlu0 %592
      %594 = vrot.lane.b32.xlu0 %v492, 91
      %v595 = vpop.permute.xlu0 %594
      %vm596 = vcmask 744448
      %v597 = vsel %vm596, %v591, %v593
      %v598 = vsel %vm596, %v593, %v595
      %602 = vst [vmem:[#allocation3 + $0xa8] sm:$0xff] %v597
      %603 = vst [vmem:[#allocation3 + $0xb0] sm:$0xff] %v598
      %604 = vst.msk [vmem:[#allocation3 + $0xb8] sm:$0xff] %vm495, %v595
      %605 = vrot.lane.b32.xlu0 %v490, 90
      %v606 = vpop.permute.xlu0 %605
      %607 = vrot.lane.b32.xlu0 %v491, 90
      %v608 = vpop.permute.xlu0 %607
      %609 = vrot.lane.b32.xlu0 %v492, 90
      %v610 = vpop.permute.xlu0 %609
      %vm611 = vcmask 736256
      %v612 = vsel %vm611, %v606, %v608
      %v613 = vsel %vm611, %v608, %v610
      %617 = vst [vmem:[#allocation3 + $0xc0] sm:$0xff] %v612
      %618 = vst [vmem:[#allocation3 + $0xc8] sm:$0xff] %v613
      %619 = vst.msk [vmem:[#allocation3 + $0xd0] sm:$0xff] %vm495, %v610
      %v620 = vld [vmem:[#allocation3] sm:$0xff]
      %v621 = vld [vmem:[#allocation3 + $0x8] sm:$0xff]
      %v622 = vld [vmem:[#allocation3 + $0x10] sm:$0xff]
      %v623 = vld [vmem:[#allocation3 + $0x18] sm:$0xff]
      %v624 = vld [vmem:[#allocation3 + $0x20] sm:$0xff]
      %v625 = vld [vmem:[#allocation3 + $0x28] sm:$0xff]
      %v626 = vld [vmem:[#allocation3 + $0x30] sm:$0xff]
      %v627 = vld [vmem:[#allocation3 + $0x38] sm:$0xff]
      %v628 = vld [vmem:[#allocation3 + $0x40] sm:$0xff]
      %v629 = vld [vmem:[#allocation3 + $0x48] sm:$0xff]
      %v630 = vld [vmem:[#allocation3 + $0x50] sm:$0xff]
      %v631 = vld [vmem:[#allocation3 + $0x58] sm:$0xff]
      %v632 = vld [vmem:[#allocation3 + $0x60] sm:$0xff]
      %v633 = vld [vmem:[#allocation3 + $0x68] sm:$0xff]
      %v634 = vld [vmem:[#allocation3 + $0x70] sm:$0xff]
      %v635 = vld [vmem:[#allocation3 + $0x78] sm:$0xff]
      %v636 = vld [vmem:[#allocation3 + $0x80] sm:$0xff]
      %v637 = vld [vmem:[#allocation3 + $0x88] sm:$0xff]
      %v638 = vld [vmem:[#allocation3 + $0x90] sm:$0xff]
      %v639 = vld [vmem:[#allocation3 + $0x98] sm:$0xff]
      %v640 = vld [vmem:[#allocation3 + $0xa0] sm:$0xff]
      %v641 = vld [vmem:[#allocation3 + $0xa8] sm:$0xff]
      %v642 = vld [vmem:[#allocation3 + $0xb0] sm:$0xff]
      %v643 = vld [vmem:[#allocation3 + $0xb8] sm:$0xff]
      %v644 = vld [vmem:[#allocation3 + $0xc0] sm:$0xff]
      %v645 = vld [vmem:[#allocation3 + $0xc8] sm:$0xff]
      %v646 = vld [vmem:[#allocation3 + $0xd0] sm:$0xff]
      %vm647 = vcmask 588800
      %v649 = vsel %vm647, %v486, 0
      %651 = vmatprep.subr.mxu0 0.0
      %652 = vmatpush1.msra.mxu0 0.0
      %653 = vmatprep.subr.mxu0 0.0
      %654 = vmatpush1.msra.mxu0 0.0
      %655 = vmatprep.subr.mxu0 0.0
      %656 = vmatpush1.msra.mxu0 0.0
      %657 = vmatprep.subr.mxu0 0.0
      %658 = vmatpush1.msra.mxu0 0.0
      %659 = vmatprep.subr.mxu0 0.0
      %660 = vmatpush1.msra.mxu0 0.0
      %661 = vmatprep.subr.mxu0 0.0
      %662 = vmatpush1.msra.mxu0 0.0
      %663 = vmatprep.subr.mxu0 0.0
      %664 = vmatpush1.msra.mxu0 0.0
      %665 = vmatprep.subr.mxu0 %v645
      %666 = vmatpush1.msra.mxu0 %v644
      %667 = vmatprep.subr.mxu0 %v642
      %668 = vmatpush1.msra.mxu0 %v641
      %669 = vmatprep.subr.mxu0 %v639
      %670 = vmatpush1.msra.mxu0 %v638
      %671 = vmatprep.subr.mxu0 %v636
      %672 = vmatpush1.msra.mxu0 %v635
      %673 = vmatprep.subr.mxu0 %v633
      %674 = vmatpush1.msra.mxu0 %v632
      %675 = vmatprep.subr.mxu0 %v630
      %676 = vmatpush1.msra.mxu0 %v629
      %677 = vmatprep.subr.mxu0 %v627
      %678 = vmatpush1.msra.mxu0 %v626
      %679 = vmatprep.subr.mxu0 %v624
      %680 = vmatpush1.msra.mxu0 %v623
      %681 = vmatprep.subr.mxu0 %v621
      %682 = vmatpush1.msra.mxu0 %v620
      %683 = vmatprep.subr.mxu0 0.0
      %684 = vmatpush2.msra.mxu0 0.0
      %685 = vmatprep.subr.mxu0 0.0
      %686 = vmatpush2.msra.mxu0 0.0
      %687 = vmatprep.subr.mxu0 0.0
      %688 = vmatpush2.msra.mxu0 0.0
      %689 = vmatprep.subr.mxu0 0.0
      %690 = vmatpush2.msra.mxu0 0.0
      %691 = vmatprep.subr.mxu0 0.0
      %692 = vmatpush2.msra.mxu0 0.0
      %693 = vmatprep.subr.mxu0 0.0
      %694 = vmatpush2.msra.mxu0 0.0
      %695 = vmatprep.subr.mxu0 0.0
      %696 = vmatpush2.msra.mxu0 0.0
      %697 = vmatprep.subr.mxu0 0.0
      %698 = vmatpush2.msra.mxu0 0.0
      %699 = vmatprep.subr.mxu0 0.0
      %700 = vmatpush2.msra.mxu0 0.0
      %701 = vmatprep.subr.mxu0 0.0
      %702 = vmatpush2.msra.mxu0 0.0
      %703 = vmatprep.subr.mxu0 0.0
      %704 = vmatpush2.msra.mxu0 0.0
      %705 = vmatprep.subr.mxu0 0.0
      %706 = vmatpush2.msra.mxu0 0.0
      %707 = vmatprep.subr.mxu0 0.0
      %708 = vmatpush2.msra.mxu0 0.0
      %709 = vmatprep.subr.mxu0 0.0
      %710 = vmatpush2.msra.mxu0 0.0
      %711 = vmatprep.subr.mxu0 0.0
      %712 = vmatpush2.msra.mxu0 0.0
      %713 = vmatprep.subr.mxu0 0.0
      %714 = vmatpush2.msra.mxu0 0.0
      %715 = vmatprep.mubr.f32.mxu0 0.0
      %716 = vmatmul.mubr.f32.gmra.mxu0 %v649
      %v717 = vpop.f32.mrf.mxu0
      %v718 = vadd.f32 %v487, %v717
      %v719 = vpop.f32.mrf.mxu0
      %v720 = vadd.f32 %v488, %v719
      %721 = vdwg.mxu0
      %722 = vmatprep.subr.mxu0 0.0
      %723 = vmatpush1.msra.mxu0 0.0
      %724 = vmatprep.subr.mxu0 0.0
      %725 = vmatpush1.msra.mxu0 0.0
      %726 = vmatprep.subr.mxu0 0.0
      %727 = vmatpush1.msra.mxu0 0.0
      %728 = vmatprep.subr.mxu0 0.0
      %729 = vmatpush1.msra.mxu0 0.0
      %730 = vmatprep.subr.mxu0 0.0
      %731 = vmatpush1.msra.mxu0 0.0
      %732 = vmatprep.subr.mxu0 0.0
      %733 = vmatpush1.msra.mxu0 0.0
      %734 = vmatprep.subr.mxu0 0.0
      %735 = vmatpush1.msra.mxu0 0.0
      %736 = vmatprep.subr.mxu0 0.0
      %737 = vmatpush1.msra.mxu0 %v646
      %738 = vmatprep.subr.mxu0 0.0
      %739 = vmatpush1.msra.mxu0 %v643
      %740 = vmatprep.subr.mxu0 0.0
      %741 = vmatpush1.msra.mxu0 %v640
      %742 = vmatprep.subr.mxu0 0.0
      %743 = vmatpush1.msra.mxu0 %v637
      %744 = vmatprep.subr.mxu0 0.0
      %745 = vmatpush1.msra.mxu0 %v634
      %746 = vmatprep.subr.mxu0 0.0
      %747 = vmatpush1.msra.mxu0 %v631
      %748 = vmatprep.subr.mxu0 0.0
      %749 = vmatpush1.msra.mxu0 %v628
      %750 = vmatprep.subr.mxu0 0.0
      %751 = vmatpush1.msra.mxu0 %v625
      %752 = vmatprep.subr.mxu0 0.0
      %753 = vmatpush1.msra.mxu0 %v622
      %754 = vmatprep.subr.mxu0 0.0
      %755 = vmatpush2.msra.mxu0 0.0
      %756 = vmatprep.subr.mxu0 0.0
      %757 = vmatpush2.msra.mxu0 0.0
      %758 = vmatprep.subr.mxu0 0.0
      %759 = vmatpush2.msra.mxu0 0.0
      %760 = vmatprep.subr.mxu0 0.0
      %761 = vmatpush2.msra.mxu0 0.0
      %762 = vmatprep.subr.mxu0 0.0
      %763 = vmatpush2.msra.mxu0 0.0
      %764 = vmatprep.subr.mxu0 0.0
      %765 = vmatpush2.msra.mxu0 0.0
      %766 = vmatprep.subr.mxu0 0.0
      %767 = vmatpush2.msra.mxu0 0.0
      %768 = vmatprep.subr.mxu0 0.0
      %769 = vmatpush2.msra.mxu0 0.0
      %770 = vmatprep.subr.mxu0 0.0
      %771 = vmatpush2.msra.mxu0 0.0
      %772 = vmatprep.subr.mxu0 0.0
      %773 = vmatpush2.msra.mxu0 0.0
      %774 = vmatprep.subr.mxu0 0.0
      %775 = vmatpush2.msra.mxu0 0.0
      %776 = vmatprep.subr.mxu0 0.0
      %777 = vmatpush2.msra.mxu0 0.0
      %778 = vmatprep.subr.mxu0 0.0
      %779 = vmatpush2.msra.mxu0 0.0
      %780 = vmatprep.subr.mxu0 0.0
      %781 = vmatpush2.msra.mxu0 0.0
      %782 = vmatprep.subr.mxu0 0.0
      %783 = vmatpush2.msra.mxu0 0.0
      %784 = vmatprep.subr.mxu0 0.0
      %785 = vmatpush2.msra.mxu0 0.0
      %786 = vmatprep.mubr.f32.mxu0 0.0
      %787 = vmatmul.mubr.f32.gmra.mxu0 %v649
      %v788 = vpop.f32.mrf.mxu0
      %v789 = vadd.f32 %v489, %v788
      %v790 = vpop.f32.mrf.mxu0
      %791 = vdwg.mxu0
      %792 = vst [vmem:[%s170] sm:$0xff] %v718
      %793 = vst [vmem:[%s170 + $0x8] sm:$0xff] %v720
      %794 = vst.msk [vmem:[%s170 + $0x10] sm:$0xff] %vm495, %v789
      %p795 = scmp.lt.s32.totalorder %s14, 1
      %s796 = scalar_select %p795, %s14, 1
      %s797 = smul.addr %s796, 3
      %s798 = smul.addr %s797, 8
      %s799 = scalar_lea.vmem %s3, %s798
      // Predicated region
      $region33: #{coord_conv_forward.1} parent=31 // pred_check
        %p800 = pneg %p100
      $region34: #{coord_conv_forward.1} parent=31 // pred_check_branch
        %802 = sbr.rel (%p800) target = $region36
      $region35: #{coord_conv_forward.1} parent=31 // pred_region
        _
      $region36: #{coord_conv_forward.1} parent=31 // pred_fallthru
        _
    $region32: #{coord_conv_forward.1} parent=5 // pred_fallthru
      _
    %p803 = scmp.le.s32.totalorder 2, %s9
    // Predicated region
    $region37: #{coord_conv_forward.1} parent=5 // pred_check
      %p804 = pneg %p803
    $region38: #{coord_conv_forward.1} parent=5 // pred_check_branch
      %806 = sbr.rel (%p804) target = $region40
    $region39: #{coord_conv_forward.1} parent=5 // pred_region
      %s807 = ssub.s32 %s9, 2
      // Predicated region
      $region41: #{coord_conv_forward.1} parent=39 // pred_check
        %p808 = pneg %p106
      $region42: #{coord_conv_forward.1} parent=39 // pred_check_branch
        %810 = sbr.rel (%p808) target = $region44
      $region43: #{coord_conv_forward.1} parent=39 // pred_region
        %p811 = scmp.lt.s32.totalorder %s15, 1
        %s812 = scalar_select %p811, %s15, 1
        %s813 = smul.addr %s812, 3
        %s814 = smul.addr %s813, 8
        %s815 = scalar_lea.vmem %s3, %s814
      $region44: #{coord_conv_forward.1} parent=39 // pred_fallthru
        _
    $region40: #{coord_conv_forward.1} parent=5 // pred_fallthru
      _
  $region6: #{coord_conv_forward.1} parent=0 // loop_footer
    %s13 = sadd.s32 1, %s9
  $region7: #{coord_conv_forward.1} parent=0 // loop_footer_branch
    %8 = sbr.rel target = $region3
  $region8: #{coord_conv_forward.1} parent=0 // loop_exit
    _

</llo_original>
